<compile_context>
chip_gen: v5e
topology: v5e:2x2
jax: 0.10.0
libtpu: 0.0.40
codegen_flags: <defaults>
</compile_context>

<pallas_src>
import functools
import math

import jax
import jax.numpy as jnp
from jax import lax
from jax.experimental import pallas as pl
from jax.experimental.pallas import tpu as pltpu


# ----------------------------------------------------------------------------
# Pallas kernel: 3x3 conv + bias + ReLU + PixelShuffle, all lane-dense
# ----------------------------------------------------------------------------
def _conv3x3_relu_pixelshuffle_kernel(x_ref, w_ref, b_ref, o_ref, *, H, W, C, r):
    # x_ref: (Nb, H+2, (W+2)*C)  zero-padded input, channels fused into lanes
    # w_ref: (9*W*C, r*W*r*C)    bf16 block-structured conv + pixel-shuffle weight
    # b_ref: (1, r*W*r*C)        f32 bias, pre-permuted/broadcast to output lanes
    # o_ref: (Nb, H, r, W*r*C)   row-phase-separated pixel-shuffled output
    Nb = x_ref.shape[0]
    WC = W * C
    WrC = W * r * C

    # im2col: each tap is a plain (sublane, lane) window of the padded input —
    # no reshape touching the lane axis, no relayout copies.
    taps = []
    for kh in range(3):
        for kw in range(3):
            taps.append(x_ref[:, kh:kh + H, kw * C:kw * C + WC])
    patches = jnp.concatenate(taps, axis=-1)                 # (Nb, H, 9*W*C)
    patches = patches.reshape(Nb * H, 9 * WC).astype(jnp.bfloat16)

    # Single MXU contraction (bf16 inputs, f32 accumulation) + f32 epilogue.
    acc = jnp.dot(patches, w_ref[...], preferred_element_type=jnp.float32)
    acc = jnp.maximum(acc + b_ref[...], 0.0)                 # (Nb*H, r*W*r*C)

    # Fused PixelShuffle: lane block i already holds output-row phase i in the
    # final (w*r + j)*C + c lane order -> r lane-dense (128-wide) slab stores.
    for i in range(r):
        o_ref[:, :, i, :] = (
            acc[:, i * WrC:(i + 1) * WrC].reshape(Nb, H, WrC).astype(o_ref.dtype))


# ----------------------------------------------------------------------------
# Wrapper-side parameter folding (done once per stage, plain JAX)
# ----------------------------------------------------------------------------
def _fold_conv_pixelshuffle_params(w_oihw, b, W, r):
    """Fold conv weight + PixelShuffle layout into one block-structured matmul
    operand.  Rows: (tap, w_in, c_in).  Cols: (row_phase i, w_out, j*C + c)."""
    Cout, Cin, KH, KW = w_oihw.shape
    C = Cout // (r * r)
    # (O, I, kh, kw) -> (kh, kw, I, c, i, j) -> (tap, I, i, j*C + c)
    w_t = jnp.transpose(w_oihw, (2, 3, 1, 0)).reshape(KH, KW, Cin, C, r, r)
    w_t = jnp.transpose(w_t, (0, 1, 2, 4, 5, 3)).reshape(KH * KW, Cin, r, r * C)
    # Block-diagonal over output width (input column w' must equal output w).
    eye_w = jnp.eye(W, dtype=w_t.dtype)
    w_big = jnp.einsum('tkim,vw->tvkiwm', w_t, eye_w)
    w_big = w_big.reshape(KH * KW * W * Cin, r * W * r * C).astype(jnp.bfloat16)

    b_perm = jnp.transpose(b.reshape(C, r, r), (1, 2, 0)).reshape(r, 1, r * C)
    b_big = jnp.broadcast_to(b_perm, (r, W, r * C)).reshape(1, r * W * r * C)
    return w_big, b_big.astype(jnp.float32)


def _pick_batch_block(N, per_item_bytes, vmem_budget=4 * 1024 * 1024):
    """Largest batch block that (a) divides N, (b) leaves >=2 grid steps when
    N >= 2 (both v7x TensorCores busy), (c) fits a modest VMEM budget."""
    cap = max(1, vmem_budget // max(per_item_bytes, 1))
    limit = N // 2 if N >= 2 else max(N, 1)
    best = 1
    for nb in range(1, max(limit, 1) + 1):
        if N % nb == 0 and nb <= cap:
            best = nb
    return best


def upsample_stage_pallas(x_nhwc, w_oihw, b, r):
    """One stage: conv3x3(pad=1) + bias + ReLU + PixelShuffle(r). NHWC -> NHWC."""
    N, H, W, C = x_nhwc.shape
    assert w_oihw.shape == (r * r * C, C, 3, 3)
    Hp, Wp = H + 2, W + 2
    WrC = W * r * C

    # Zero-pad (PyTorch padding=1) and fuse channels into the lane axis.
    x_flat = jnp.pad(x_nhwc, ((0, 0), (1, 1), (1, 1), (0, 0))).reshape(N, Hp, Wp * C)
    w_big, b_big = _fold_conv_pixelshuffle_params(w_oihw, b, W, r)

    per_item_bytes = (Hp * Wp * C + H * r * WrC) * x_nhwc.dtype.itemsize * 2
    Nb = _pick_batch_block(N, per_item_bytes)

    kernel = functools.partial(
        _conv3x3_relu_pixelshuffle_kernel, H=H, W=W, C=C, r=r)

    out = pl.pallas_call(
        kernel,
        out_shape=jax.ShapeDtypeStruct((N, H, r, WrC), x_nhwc.dtype),
        grid_spec=pltpu.PrefetchScalarGridSpec(
            num_scalar_prefetch=0,
            grid=(N // Nb,),
            in_specs=[
                pl.BlockSpec((Nb, Hp, Wp * C), lambda n: (n, 0, 0)),
                pl.BlockSpec(w_big.shape, lambda n: (0, 0)),
                pl.BlockSpec(b_big.shape, lambda n: (0, 0)),
            ],
            out_specs=pl.BlockSpec((Nb, H, r, WrC), lambda n: (n, 0, 0, 0)),
        ),
        compiler_params=pltpu.CompilerParams(
            dimension_semantics=("parallel",),
            vmem_limit_bytes=32 * 1024 * 1024,
        ),
    )(x_flat, w_big, b_big)

    # (N, H, r, W*r*C) -> (N, H*r, W*r, C): contiguous, metadata-only reshape.
    return out.reshape(N, H * r, W * r, C)


# ----------------------------------------------------------------------------
# Pure-JAX helpers for the reference path
# ----------------------------------------------------------------------------
def pixel_shuffle_nchw(x, r):
    N, Cr2, H, W = x.shape
    C = Cr2 // (r * r)
    x = x.reshape(N, C, r, r, H, W)
    x = jnp.transpose(x, (0, 1, 4, 2, 5, 3))
    return x.reshape(N, C, H * r, W * r)


# ----------------------------------------------------------------------------
# _UpsampleBlock forward (interface is NCHW, like PyTorch)
# ----------------------------------------------------------------------------
class UpsampleBlockPallas:
    def __init__(self, n_channels, scale, key):
        # init_weights() in the reference is a no-op; use a deterministic
        # synthetic init (normal * 0.05 weights, small random bias).
        self.scale = scale
        self.stages = []  # list of (w_oihw, b, r)
        if scale in (2, 4, 8):
            for _ in range(int(round(math.log2(scale)))):  # fp-safe log2
                key, wk, bk = jax.random.split(key, 3)
                w = jax.random.normal(
                    wk, (4 * n_channels, n_channels, 3, 3), jnp.float32) * 0.05
                b = jax.random.normal(bk, (4 * n_channels,), jnp.float32) * 0.05
                self.stages.append((w, b, 2))
        elif scale == 3:
            key, wk, bk = jax.random.split(key, 3)
            w = jax.random.normal(
                wk, (9 * n_channels, n_channels, 3, 3), jnp.float32) * 0.05
            b = jax.random.normal(bk, (9 * n_channels,), jnp.float32) * 0.05
            self.stages.append((w, b, 3))
        # else: empty body (identity), same as the reference module.

    def __call__(self, x_nchw):
        if not self.stages:
            return x_nchw
        x = jnp.transpose(x_nchw, (0, 2, 3, 1))          # NCHW -> NHWC (once)
        for (w, b, r) in self.stages:
            x = upsample_stage_pallas(x, w, b, r)        # fused stage, NHWC
        return jnp.transpose(x, (0, 3, 1, 2))            # NHWC -> NCHW (once)

    # Pure-JAX f32 reference (numerical sanity check).
    def reference(self, x_nchw):
        x = x_nchw
        for (w, b, r) in self.stages:
            y = lax.conv_general_dilated(
                x, w, window_strides=(1, 1), padding="SAME",
                dimension_numbers=("NCHW", "OIHW", "NCHW"))
            y = jnp.maximum(y + b[None, :, None, None], 0.0)
            x = pixel_shuffle_nchw(y, r)
        return x


if __name__ == "__main__":
    key = jax.random.PRNGKey(0)
    key, xk, mk = jax.random.split(key, 3)

    n_channels, scale = 4, 2
    x = jax.random.normal(xk, (2, n_channels, 16, 16), jnp.float32)  # NCHW

    block = UpsampleBlockPallas(n_channels, scale, mk)

    out = jax.block_until_ready(block(x))
    assert out.shape == (2, n_channels, 16 * scale, 16 * scale), out.shape

    ref = jax.block_until_ready(block.reference(x))
    err = float(jnp.max(jnp.abs(out - ref)))
    # bf16 MXU inputs with f32 accumulation -> ~1e-3 expected error.
    assert err < 2e-2, err

    print("KERNEL_OK")
</pallas_src>

<mosaic_0001>
module attributes {stable_mosaic.version = 11 : i64} {
  func.func @_conv3x3_relu_pixelshuffle_kernel(%arg0: i32, %arg1: memref<1x18x72xf32, #tpu.memory_space<vmem>>, %arg2: memref<576x256xbf16, #tpu.memory_space<vmem>>, %arg3: memref<1x256xf32, #tpu.memory_space<vmem>>, %arg4: memref<1x16x2x128xf32, #tpu.memory_space<vmem>>) attributes {dimension_semantics = [#tpu.dimension_semantics<parallel>], iteration_bounds = array<i64: 2>, scalar_prefetch = 0 : i64, scratch_operands = 0 : i64, tpu.core_type = #tpu.core_type<tc>, window_params = [{transform_indices = @transform_0, window_bounds = array<i64: 1, 18, 72>}, {pipeline_mode = #tpu.pipeline_mode<synchronous>, transform_indices = @transform_1, window_bounds = array<i64: 576, 256>}, {pipeline_mode = #tpu.pipeline_mode<synchronous>, transform_indices = @transform_2, window_bounds = array<i64: 1, 256>}, {transform_indices = @transform_3, window_bounds = array<i64: 1, 16, 2, 128>}]} {
    %c0 = arith.constant 0 : index
    %c0_0 = arith.constant 0 : index
    %c0_1 = arith.constant 0 : index
    %0 = vector.load %arg1[%c0, %c0_0, %c0_1] : memref<1x18x72xf32, #tpu.memory_space<vmem>>, vector<1x16x64xf32>
    %c0_2 = arith.constant 0 : index
    %c0_3 = arith.constant 0 : index
    %c4 = arith.constant 4 : index
    %1 = vector.load %arg1[%c0_2, %c0_3, %c4] : memref<1x18x72xf32, #tpu.memory_space<vmem>>, vector<1x16x64xf32>
    %c0_4 = arith.constant 0 : index
    %c0_5 = arith.constant 0 : index
    %c8 = arith.constant 8 : index
    %2 = vector.load %arg1[%c0_4, %c0_5, %c8] : memref<1x18x72xf32, #tpu.memory_space<vmem>>, vector<1x16x64xf32>
    %c0_6 = arith.constant 0 : index
    %c1 = arith.constant 1 : index
    %c0_7 = arith.constant 0 : index
    %3 = vector.load %arg1[%c0_6, %c1, %c0_7] : memref<1x18x72xf32, #tpu.memory_space<vmem>>, vector<1x16x64xf32>
    %c0_8 = arith.constant 0 : index
    %c1_9 = arith.constant 1 : index
    %c4_10 = arith.constant 4 : index
    %4 = vector.load %arg1[%c0_8, %c1_9, %c4_10] : memref<1x18x72xf32, #tpu.memory_space<vmem>>, vector<1x16x64xf32>
    %c0_11 = arith.constant 0 : index
    %c1_12 = arith.constant 1 : index
    %c8_13 = arith.constant 8 : index
    %5 = vector.load %arg1[%c0_11, %c1_12, %c8_13] : memref<1x18x72xf32, #tpu.memory_space<vmem>>, vector<1x16x64xf32>
    %c0_14 = arith.constant 0 : index
    %c2 = arith.constant 2 : index
    %c0_15 = arith.constant 0 : index
    %6 = vector.load %arg1[%c0_14, %c2, %c0_15] : memref<1x18x72xf32, #tpu.memory_space<vmem>>, vector<1x16x64xf32>
    %c0_16 = arith.constant 0 : index
    %c2_17 = arith.constant 2 : index
    %c4_18 = arith.constant 4 : index
    %7 = vector.load %arg1[%c0_16, %c2_17, %c4_18] : memref<1x18x72xf32, #tpu.memory_space<vmem>>, vector<1x16x64xf32>
    %c0_19 = arith.constant 0 : index
    %c2_20 = arith.constant 2 : index
    %c8_21 = arith.constant 8 : index
    %8 = vector.load %arg1[%c0_19, %c2_20, %c8_21] : memref<1x18x72xf32, #tpu.memory_space<vmem>>, vector<1x16x64xf32>
    %9 = tpu.concatenate %0, %1, %2, %3, %4, %5, %6, %7, %8 in 2 : vector<1x16x64xf32>, vector<1x16x64xf32>, vector<1x16x64xf32>, vector<1x16x64xf32>, vector<1x16x64xf32>, vector<1x16x64xf32>, vector<1x16x64xf32>, vector<1x16x64xf32>, vector<1x16x64xf32> -> vector<1x16x576xf32>
    %10 = vector.shape_cast %9 : vector<1x16x576xf32> to vector<16x576xf32>
    %11 = arith.truncf %10 : vector<16x576xf32> to vector<16x576xbf16>
    %c0_22 = arith.constant 0 : index
    %c0_23 = arith.constant 0 : index
    %12 = vector.load %arg2[%c0_22, %c0_23] : memref<576x256xbf16, #tpu.memory_space<vmem>>, vector<576x256xbf16>
    %cst = arith.constant dense<0.000000e+00> : vector<16x256xf32>
    %13 = tpu.matmul %11, %12, %cst {dimension_numbers = #tpu.dot_dimension_numbers<[1], [0], [0], [1], [0, 0, 1, 1], [], []>} : vector<16x576xbf16>, vector<576x256xbf16>, vector<16x256xf32> -> vector<16x256xf32>
    %c0_24 = arith.constant 0 : index
    %c0_25 = arith.constant 0 : index
    %14 = vector.load %arg3[%c0_24, %c0_25] : memref<1x256xf32, #tpu.memory_space<vmem>>, vector<1x256xf32>
    %15 = vector.broadcast %14 : vector<1x256xf32> to vector<16x256xf32>
    %16 = arith.addf %13, %15 : vector<16x256xf32>
    %cst_26 = arith.constant 0.000000e+00 : f32
    %17 = vector.broadcast %cst_26 : f32 to vector<16x256xf32>
    %18 = arith.maximumf %16, %17 : vector<16x256xf32>
    %19 = vector.extract_strided_slice %18 {offsets = [0, 0], sizes = [16, 128], strides = [1, 1]} : vector<16x256xf32> to vector<16x128xf32>
    %20 = vector.shape_cast %19 : vector<16x128xf32> to vector<1x16x128xf32>
    %c0_27 = arith.constant 0 : index
    %c0_28 = arith.constant 0 : index
    %c0_29 = arith.constant 0 : index
    %c0_30 = arith.constant 0 : index
    %21 = vector.load %arg4[%c0_27, %c0_28, %c0_29, %c0_30] : memref<1x16x2x128xf32, #tpu.memory_space<vmem>>, vector<1x16x1x128xf32>
    %22 = vector.shape_cast %21 : vector<1x16x1x128xf32> to vector<1x16x128xf32>
    %23 = vector.shape_cast %20 : vector<1x16x128xf32> to vector<1x16x1x128xf32>
    tpu.vector_store %arg4[%c0_27, %c0_28, %c0_29, %c0_30], %23 {strides = array<i32>} : memref<1x16x2x128xf32, #tpu.memory_space<vmem>>, vector<1x16x1x128xf32>,
    %24 = vector.extract_strided_slice %18 {offsets = [0, 128], sizes = [16, 128], strides = [1, 1]} : vector<16x256xf32> to vector<16x128xf32>
    %25 = vector.shape_cast %24 : vector<16x128xf32> to vector<1x16x128xf32>
    %c0_31 = arith.constant 0 : index
    %c0_32 = arith.constant 0 : index
    %c1_33 = arith.constant 1 : index
    %c0_34 = arith.constant 0 : index
    %26 = vector.load %arg4[%c0_31, %c0_32, %c1_33, %c0_34] : memref<1x16x2x128xf32, #tpu.memory_space<vmem>>, vector<1x16x1x128xf32>
    %27 = vector.shape_cast %26 : vector<1x16x1x128xf32> to vector<1x16x128xf32>
    %28 = vector.shape_cast %25 : vector<1x16x128xf32> to vector<1x16x1x128xf32>
    tpu.vector_store %arg4[%c0_31, %c0_32, %c1_33, %c0_34], %28 {strides = array<i32>} : memref<1x16x2x128xf32, #tpu.memory_space<vmem>>, vector<1x16x1x128xf32>,
    return
  }
  func.func @transform_0(%arg0: i32) -> (i32, i32, i32) {
    %c0_i32 = arith.constant 0 : i32
    %c0_i32_0 = arith.constant 0 : i32
    %c0_i32_1 = arith.constant 0 : i32
    return %arg0, %c0_i32, %c0_i32_0 : i32, i32, i32
  }
  func.func @transform_1(%arg0: i32) -> (i32, i32) {
    %c0_i32 = arith.constant 0 : i32
    %c0_i32_0 = arith.constant 0 : i32
    %c0_i32_1 = arith.constant 0 : i32
    return %c0_i32, %c0_i32_0 : i32, i32
  }
  func.func @transform_2(%arg0: i32) -> (i32, i32) {
    %c0_i32 = arith.constant 0 : i32
    %c0_i32_0 = arith.constant 0 : i32
    %c0_i32_1 = arith.constant 0 : i32
    return %c0_i32, %c0_i32_0 : i32, i32
  }
  func.func @transform_3(%arg0: i32) -> (i32, i32, i32, i32) {
    %c0_i32 = arith.constant 0 : i32
    %c0_i32_0 = arith.constant 0 : i32
    %c0_i32_1 = arith.constant 0 : i32
    %c0_i32_2 = arith.constant 0 : i32
    return %arg0, %c0_i32, %c0_i32_0, %c0_i32_1 : i32, i32, i32, i32
  }
}

</mosaic_0001>

<llo_original>
// kernel: tpu_custom_call.1
$region0: #{tpu_custom_call.1}
  #allocation0 [shape = 'u32[]', space=smem, size = 0x4, offset = 0x4, fixed_abs, tag = 'smem constant byte address 0x4 - core index']
  #allocation1 [shape = 'u32[72,128]{1,0:T(1,128)}', space=vmem, size = 0x9000, scoped, tag = 'internal scratch']
  %s0 = inlined_call_operand.vmem [shape: f32[2,18,72], index: 0, kind: input, shape index: {}]
  %s1 = inlined_call_operand.hbm [shape: bf16[576,256], index: 1, kind: input, shape index: {}]
  %s2 = inlined_call_operand.vmem [shape: f32[1,256], index: 2, kind: input, shape index: {}]
  %s3 = inlined_call_operand.hbm [shape: f32[2,16,2,128], index: 3, kind: output, shape index: {}]
  %s4 = sld [smem:[#allocation0]]
  $region49: #{tpu_custom_call.1} parent=0
    _
  %s6 = ssub.s32 1, %s4
  %s7 = scalar_select 0, %s6, %s4
  $region1: #{tpu_custom_call.1} parent=0
    #allocation2 [shape = 'u8[294912]{0}', space=vmem, size = 0x48000, scoped, tag = 'input window, operand 1, single buffered']
    #allocation3 [shape = 's32[2]{0}', space=sflag, size = 0x8, scoped, tag = 'scoped memory for tpu_custom_call.1']
    #allocation4 [shape = 's32[2]{0}', space=sflag, size = 0x8, scoped, tag = 'scoped memory for tpu_custom_call.1']
    #allocation5 [shape = 'u8[32768]{0}', space=vmem, size = 0x8000, scoped, tag = 'output window, operand 0']
    %8 = vsyncpa [#allocation3], 0
    %9 = vsyncpa [#allocation4], 0
    %s10 = scalar_lea.sflag [#allocation4], 1
    %11 = vsyncpa %s10, 0
    loop: start=0, step=1, limit=4
    $region2: #{tpu_custom_call.1} parent=1 // loop_pre_header
      _
    $region3: #{tpu_custom_call.1} parent=1 // loop_header
      %s13 = sphi 0, %s17
      %p14 = scmp.ge.s32.totalorder %s13, 4
      %s23 = sphi 0, %s25
      %s26 = sphi 0, %s23
      %s27 = sphi 0, %s26
      %s43 = sphi 0, %s27
      %s47 = sphi 0, %s47
      %s49 = sphi 0, %s47
      %s50 = sphi 0, %s49
      %s64 = sphi 0, %s50
      %s68 = sphi 0, %s68
      %s70 = sphi 0, %s68
      %s71 = sphi 0, %s70
      %s85 = sphi 0, %s71
      %s91 = sphi 0, %s93
      %s94 = sphi 0, %s91
      %s95 = sphi 0, %s94
      %s111 = sphi 0, %s95
    $region4: #{tpu_custom_call.1} parent=1 // loop_header_branch
      %16 = sbr.rel (%p14) target = $region8
    $region5: #{tpu_custom_call.1} parent=1 // loop_body
      %s18 = ssub.s32 %s13, 1
      %s19 = ssub.s32 %s13, 2
      %s20 = sadd.s32 %s13, 1
      %s21 = ssub.s32 %s13, %s20
      %p22 = scmp.eq.s32.totalorder %s21, 0
      %s24 = sadd.s32 %s23, 1
      %s25 = scalar_select %p22, %s23, %s24
      %p28 = pneg %p22
      %p29 = scmp.eq.s32.totalorder %s13, 1
      %p30 = por %p28, %p29
      %p31 = scmp.ne.s32.totalorder %s23, %s26
      %p32 = scmp.eq.s32.totalorder %s13, 0
      %p33 = por %p31, %p32
      %p34 = scmp.ne.s32.totalorder %s23, %s26
      %p35 = scmp.eq.s32.totalorder %s18, 1
      %p36 = por %p34, %p35
      %p37 = scmp.ne.s32.totalorder %s26, %s27
      %p38 = scmp.eq.s32.totalorder %s18, 0
      %p39 = por %p37, %p38
      %p40 = scmp.ne.s32.totalorder %s26, %s27
      %p41 = scmp.eq.s32.totalorder %s19, 1
      %p42 = por %p40, %p41
      %p44 = scmp.ne.s32.totalorder %s27, %s43
      %p45 = scmp.eq.s32.totalorder %s19, 0
      %p46 = por %p44, %p45
      %s48 = sadd.s32 %s47, 1
      %p51 = scmp.eq.s32.totalorder %s13, 1
      %p52 = scmp.ne.s32.totalorder %s47, %s49
      %p53 = scmp.eq.s32.totalorder %s13, 0
      %p54 = por %p52, %p53
      %p55 = scmp.ne.s32.totalorder %s47, %s49
      %p56 = scmp.eq.s32.totalorder %s18, 1
      %p57 = por %p55, %p56
      %p58 = scmp.ne.s32.totalorder %s49, %s50
      %p59 = scmp.eq.s32.totalorder %s18, 0
      %p60 = por %p58, %p59
      %p61 = scmp.ne.s32.totalorder %s49, %s50
      %p62 = scmp.eq.s32.totalorder %s19, 1
      %p63 = por %p61, %p62
      %p65 = scmp.ne.s32.totalorder %s50, %s64
      %p66 = scmp.eq.s32.totalorder %s19, 0
      %p67 = por %p65, %p66
      %s69 = sadd.s32 %s68, 1
      %p72 = scmp.eq.s32.totalorder %s13, 1
      %p73 = scmp.ne.s32.totalorder %s68, %s70
      %p74 = scmp.eq.s32.totalorder %s13, 0
      %p75 = por %p73, %p74
      %p76 = scmp.ne.s32.totalorder %s68, %s70
      %p77 = scmp.eq.s32.totalorder %s18, 1
      %p78 = por %p76, %p77
      %p79 = scmp.ne.s32.totalorder %s70, %s71
      %p80 = scmp.eq.s32.totalorder %s18, 0
      %p81 = por %p79, %p80
      %p82 = scmp.ne.s32.totalorder %s70, %s71
      %p83 = scmp.eq.s32.totalorder %s19, 1
      %p84 = por %p82, %p83
      %p86 = scmp.ne.s32.totalorder %s71, %s85
      %p87 = scmp.eq.s32.totalorder %s19, 0
      %p88 = por %p86, %p87
      %s89 = ssub.s32 %s13, %s20
      %p90 = scmp.eq.s32.totalorder %s89, 0
      %s92 = sadd.s32 %s91, 1
      %s93 = scalar_select %p90, %s91, %s92
      %p96 = pneg %p90
      %p97 = scmp.eq.s32.totalorder %s13, 1
      %p98 = por %p96, %p97
      %p99 = scmp.ne.s32.totalorder %s91, %s94
      %p100 = scmp.eq.s32.totalorder %s13, 0
      %p101 = por %p99, %p100
      %p102 = scmp.ne.s32.totalorder %s91, %s94
      %p103 = scmp.eq.s32.totalorder %s18, 1
      %p104 = por %p102, %p103
      %p105 = scmp.ne.s32.totalorder %s94, %s95
      %p106 = scmp.eq.s32.totalorder %s18, 0
      %p107 = por %p105, %p106
      %p108 = scmp.ne.s32.totalorder %s94, %s95
      %p109 = scmp.eq.s32.totalorder %s19, 1
      %p110 = por %p108, %p109
      %p112 = scmp.ne.s32.totalorder %s95, %s111
      %p113 = scmp.eq.s32.totalorder %s19, 0
      %p114 = por %p112, %p113
      %p115 = scmp.le.s32.totalorder 1, %s13
      %p116 = scmp.lt.s32.totalorder %s13, 3
      %p117 = pnand %p115, %p116
      %p118 = pneg %p117
      // Predicated region
      $region9: #{tpu_custom_call.1} parent=5 // pred_check
        _
      $region10: #{tpu_custom_call.1} parent=5 // pred_check_branch
        %120 = sbr.rel (%p117) target = $region12
      $region11: #{tpu_custom_call.1} parent=5 // pred_region
        %s121 = ssub.s32 %s13, 1
        // Predicated region
        $region13: #{tpu_custom_call.1} parent=11 // pred_check
          %p122 = pneg %p60
        $region14: #{tpu_custom_call.1} parent=11 // pred_check_branch
          %124 = sbr.rel (%p122) target = $region16
        $region15: #{tpu_custom_call.1} parent=11 // pred_region
          %126 = vsyncadd [#allocation3], 0
          %s127 = sshll.u32 %s1, 4
          %s128 = int_to_ptr.hbm [resolvable:$true] %s127
          %s129 = sshll.u32 [#allocation2], 4
          %s130 = int_to_ptr.vmem [resolvable:$true] %s129
          %135 = dma.hbm_to_vmem [thread:$0]  %s128, 9216, %s130, [#allocation3], 128, 128, 8
        $region16: #{tpu_custom_call.1} parent=11 // pred_fallthru
          _
        // Predicated region
        $region17: #{tpu_custom_call.1} parent=11 // pred_check
          %p136 = pneg %p81
        $region18: #{tpu_custom_call.1} parent=11 // pred_check_branch
          %138 = sbr.rel (%p136) target = $region20
        $region19: #{tpu_custom_call.1} parent=11 // pred_region
          _
        $region20: #{tpu_custom_call.1} parent=11 // pred_fallthru
          _
      $region12: #{tpu_custom_call.1} parent=5 // pred_fallthru
        _
      %p139 = scmp.lt.s32.totalorder %s13, 2
      // Predicated region
      $region21: #{tpu_custom_call.1} parent=5 // pred_check
        %p140 = pneg %p139
      $region22: #{tpu_custom_call.1} parent=5 // pred_check_branch
        %142 = sbr.rel (%p140) target = $region24
      $region23: #{tpu_custom_call.1} parent=5 // pred_region
        // Predicated region
        $region25: #{tpu_custom_call.1} parent=23 // pred_check
          %p143 = pneg %p33
        $region26: #{tpu_custom_call.1} parent=23 // pred_check_branch
          %145 = sbr.rel (%p143) target = $region28
        $region27: #{tpu_custom_call.1} parent=23 // pred_region
          %p146 = scmp.lt.s32.totalorder %s13, 1
          %s147 = scalar_select %p146, %s13, 1
          %s148 = smul.addr %s147, 3
          %s149 = smul.addr %s148, 8
          %s150 = scalar_lea.vmem %s0, %s149
        $region28: #{tpu_custom_call.1} parent=23 // pred_fallthru
          _
      $region24: #{tpu_custom_call.1} parent=5 // pred_fallthru
        _
      %p151 = scmp.le.s32.totalorder 1, %s13
      %p152 = scmp.lt.s32.totalorder %s13, 3
      %p153 = pnand %p151, %p152
      %p154 = pneg %p153
      // Predicated region
      $region29: #{tpu_custom_call.1} parent=5 // pred_check
        _
      $region30: #{tpu_custom_call.1} parent=5 // pred_check_branch
        %156 = sbr.rel (%p153) target = $region32
      $region31: #{tpu_custom_call.1} parent=5 // pred_region
        %s157 = ssub.s32 %s13, 1
        // Predicated region
        $region33: #{tpu_custom_call.1} parent=31 // pred_check
          %p158 = pneg %p60
        $region34: #{tpu_custom_call.1} parent=31 // pred_check_branch
          %160 = sbr.rel (%p158) target = $region36
        $region35: #{tpu_custom_call.1} parent=31 // pred_region
          %162 = dma.done [#allocation3], 9216
        $region36: #{tpu_custom_call.1} parent=31 // pred_fallthru
          _
        %p163 = scmp.lt.s32.totalorder %s18, 1
        %s164 = scalar_select %p163, %s18, 1
        %s165 = smul.addr %s164, 3
        %s166 = smul.addr %s165, 8
        %s167 = scalar_lea.vmem %s0, %s166
        %p168 = pneg %p39
        %p169 = pneg %p36
        %p170 = pneg %p60
        %p171 = pneg %p57
        %p172 = pneg %p81
        %p173 = pneg %p78
        %p174 = pneg %p107
        %p175 = pneg %p104
        %s176 = sand.u32 %s94, 1
        %s177 = scalar_lea.sflag [#allocation4], %s176
        %s178 = sand.u32 %s94, 1
        %s179 = smul.addr %s178, 32
        %s180 = scalar_lea.vmem [#allocation5], %s179
        %p181 = scmp.lt.s32.totalorder %s18, 1
        %s182 = scalar_select %p181, %s18, 1
        %s183 = smul.addr %s182, 3
        %s184 = smul.addr %s183, 8
        %s185 = scalar_lea.vmem %s0, %s184
        %v187 = vld [vmem:[%s185] sm:$0xff]
        %v188 = vld [vmem:[%s185 + $0x8] sm:$0xff]
        %v189 = vld [vmem:[%s185 + $0x1] sm:$0xff]
        %v190 = vld [vmem:[%s185 + $0x9] sm:$0xff]
        %v191 = vld [vmem:[%s185 + $0x2] sm:$0xff]
        %v192 = vld [vmem:[%s185 + $0xa] sm:$0xff]
        %195 = vrot.lane.b32.xlu0 %v187, 60
        %v196 = vpop.permute.xlu0 %195
        %197 = vrot.lane.b32.xlu0 %v188, 60
        %v198 = vpop.permute.xlu0 %197
        %201 = vrot.lane.b32.xlu0 %v187, 120
        %v202 = vpop.permute.xlu0 %201
        %203 = vrot.lane.b32.xlu0 %v188, 120
        %v204 = vpop.permute.xlu0 %203
        %209 = vrot.lane.b32.xlu0 %v189, 64
        %v210 = vpop.permute.xlu0 %209
        %211 = vrot.lane.b32.xlu0 %v190, 64
        %v212 = vpop.permute.xlu0 %211
        %215 = vrot.lane.b32.xlu0 %v189, 124
        %v216 = vpop.permute.xlu0 %215
        %217 = vrot.lane.b32.xlu0 %v190, 124
        %v218 = vpop.permute.xlu0 %217
        %221 = vrot.lane.b32.xlu0 %v189, 56
        %v222 = vpop.permute.xlu0 %221
        %223 = vrot.lane.b32.xlu0 %v190, 56
        %v224 = vpop.permute.xlu0 %223
        %229 = vrot.lane.b32.xlu0 %v191, 60
        %v230 = vpop.permute.xlu0 %229
        %231 = vrot.lane.b32.xlu0 %v192, 60
        %v232 = vpop.permute.xlu0 %231
        %235 = vrot.lane.b32.xlu0 %v191, 120
        %v236 = vpop.permute.xlu0 %235
        %237 = vrot.lane.b32.xlu0 %v192, 120
        %v238 = vpop.permute.xlu0 %237
        %vm241 = vcmask 523264
        %v242 = vsel %vm241, %v187, %v196
        %v243 = vsel %vm241, %v188, %v198
        %v244 = vsel %vm241, %v202, %v210
        %v245 = vsel %vm241, %v204, %v212
        %v246 = vsel %vm241, %v216, %v222
        %v247 = vsel %vm241, %v218, %v224
        %v248 = vsel %vm241, %v191, %v230
        %v249 = vsel %vm241, %v192, %v232
        %v250 = vpack.c.bf16 %v243, %v242
        %v251 = vpack.c.bf16 %v245, %v244
        %v252 = vpack.c.bf16 %v247, %v246
        %v253 = vpack.c.bf16 %v249, %v248
        %v254 = vpack.c.bf16 %v238, %v236
        %v255 = vld [vmem:[#allocation2] sm:$0xff]
        %v256 = vld [vmem:[#allocation2 + $0x8] sm:$0xff]
        %v257 = vld [vmem:[#allocation2 + $0x10] sm:$0xff]
        %v258 = vld [vmem:[#allocation2 + $0x18] sm:$0xff]
        %v259 = vld [vmem:[#allocation2 + $0x20] sm:$0xff]
        %v260 = vld [vmem:[#allocation2 + $0x28] sm:$0xff]
        %v261 = vld [vmem:[#allocation2 + $0x30] sm:$0xff]
        %v262 = vld [vmem:[#allocation2 + $0x38] sm:$0xff]
        %v263 = vld [vmem:[#allocation2 + $0x40] sm:$0xff]
        %v264 = vld [vmem:[#allocation2 + $0x48] sm:$0xff]
        %v265 = vld [vmem:[#allocation2 + $0x50] sm:$0xff]
        %v266 = vld [vmem:[#allocation2 + $0x58] sm:$0xff]
        %v267 = vld [vmem:[#allocation2 + $0x60] sm:$0xff]
        %v268 = vld [vmem:[#allocation2 + $0x68] sm:$0xff]
        %v269 = vld [vmem:[#allocation2 + $0x70] sm:$0xff]
        %v270 = vld [vmem:[#allocation2 + $0x78] sm:$0xff]
        %v271 = vld [vmem:[#allocation2 + $0x80] sm:$0xff]
        %v272 = vld [vmem:[#allocation2 + $0x88] sm:$0xff]
        %v273 = vld [vmem:[#allocation2 + $0x90] sm:$0xff]
        %v274 = vld [vmem:[#allocation2 + $0x98] sm:$0xff]
        %v275 = vld [vmem:[#allocation2 + $0xa0] sm:$0xff]
        %v276 = vld [vmem:[#allocation2 + $0xa8] sm:$0xff]
        %v277 = vld [vmem:[#allocation2 + $0xb0] sm:$0xff]
        %v278 = vld [vmem:[#allocation2 + $0xb8] sm:$0xff]
        %v279 = vld [vmem:[#allocation2 + $0xc0] sm:$0xff]
        %v280 = vld [vmem:[#allocation2 + $0xc8] sm:$0xff]
        %v281 = vld [vmem:[#allocation2 + $0xd0] sm:$0xff]
        %v282 = vld [vmem:[#allocation2 + $0xd8] sm:$0xff]
        %v283 = vld [vmem:[#allocation2 + $0xe0] sm:$0xff]
        %v284 = vld [vmem:[#allocation2 + $0xe8] sm:$0xff]
        %v285 = vld [vmem:[#allocation2 + $0xf0] sm:$0xff]
        %v286 = vld [vmem:[#allocation2 + $0xf8] sm:$0xff]
        %v287 = vld [vmem:[#allocation2 + $0x100] sm:$0xff]
        %v288 = vld [vmem:[#allocation2 + $0x108] sm:$0xff]
        %v289 = vld [vmem:[#allocation2 + $0x110] sm:$0xff]
        %v290 = vld [vmem:[#allocation2 + $0x118] sm:$0xff]
        %v291 = vld [vmem:[#allocation2 + $0x120] sm:$0xff]
        %v292 = vld [vmem:[#allocation2 + $0x128] sm:$0xff]
        %v293 = vld [vmem:[#allocation2 + $0x130] sm:$0xff]
        %v294 = vld [vmem:[#allocation2 + $0x138] sm:$0xff]
        %v295 = vld [vmem:[#allocation2 + $0x140] sm:$0xff]
        %v296 = vld [vmem:[#allocation2 + $0x148] sm:$0xff]
        %v297 = vld [vmem:[#allocation2 + $0x150] sm:$0xff]
        %v298 = vld [vmem:[#allocation2 + $0x158] sm:$0xff]
        %v299 = vld [vmem:[#allocation2 + $0x160] sm:$0xff]
        %v300 = vld [vmem:[#allocation2 + $0x168] sm:$0xff]
        %v301 = vld [vmem:[#allocation2 + $0x170] sm:$0xff]
        %v302 = vld [vmem:[#allocation2 + $0x178] sm:$0xff]
        %v303 = vld [vmem:[#allocation2 + $0x180] sm:$0xff]
        %v304 = vld [vmem:[#allocation2 + $0x188] sm:$0xff]
        %v305 = vld [vmem:[#allocation2 + $0x190] sm:$0xff]
        %v306 = vld [vmem:[#allocation2 + $0x198] sm:$0xff]
        %v307 = vld [vmem:[#allocation2 + $0x1a0] sm:$0xff]
        %v308 = vld [vmem:[#allocation2 + $0x1a8] sm:$0xff]
        %v309 = vld [vmem:[#allocation2 + $0x1b0] sm:$0xff]
        %v310 = vld [vmem:[#allocation2 + $0x1b8] sm:$0xff]
        %v311 = vld [vmem:[#allocation2 + $0x1c0] sm:$0xff]
        %v312 = vld [vmem:[#allocation2 + $0x1c8] sm:$0xff]
        %v313 = vld [vmem:[#allocation2 + $0x1d0] sm:$0xff]
        %v314 = vld [vmem:[#allocation2 + $0x1d8] sm:$0xff]
        %v315 = vld [vmem:[#allocation2 + $0x1e0] sm:$0xff]
        %v316 = vld [vmem:[#allocation2 + $0x1e8] sm:$0xff]
        %v317 = vld [vmem:[#allocation2 + $0x1f0] sm:$0xff]
        %v318 = vld [vmem:[#allocation2 + $0x1f8] sm:$0xff]
        %v319 = vld [vmem:[#allocation2 + $0x200] sm:$0xff]
        %v320 = vld [vmem:[#allocation2 + $0x208] sm:$0xff]
        %v321 = vld [vmem:[#allocation2 + $0x210] sm:$0xff]
        %v322 = vld [vmem:[#allocation2 + $0x218] sm:$0xff]
        %v323 = vld [vmem:[#allocation2 + $0x220] sm:$0xff]
        %v324 = vld [vmem:[#allocation2 + $0x228] sm:$0xff]
        %v325 = vld [vmem:[#allocation2 + $0x230] sm:$0xff]
        %v326 = vld [vmem:[#allocation2 + $0x238] sm:$0xff]
        %v327 = vld [vmem:[%s2] sm:$0x3]
        %v329 = vperm.slane %v327, 0
        %v330 = vperm.slane %v327, 1
        %v405 = vunpack.c.l.b16 %v255
        %v406 = vunpack.c.h.b16 %v255
        %v407 = vunpack.c.l.b16 %v256
        %v408 = vunpack.c.h.b16 %v256
        %v409 = vunpack.c.l.b16 %v257
        %v410 = vunpack.c.h.b16 %v257
        %v411 = vunpack.c.l.b16 %v258
        %v412 = vunpack.c.h.b16 %v258
        %v413 = vunpack.c.l.b16 %v259
        %v414 = vunpack.c.h.b16 %v259
        %v415 = vunpack.c.l.b16 %v260
        %v416 = vunpack.c.h.b16 %v260
        %v417 = vunpack.c.l.b16 %v261
        %v418 = vunpack.c.h.b16 %v261
        %v419 = vunpack.c.l.b16 %v262
        %v420 = vunpack.c.h.b16 %v262
        %v421 = vunpack.c.l.b16 %v263
        %v422 = vunpack.c.h.b16 %v263
        %v423 = vunpack.c.l.b16 %v264
        %v424 = vunpack.c.h.b16 %v264
        %v425 = vunpack.c.l.b16 %v265
        %v426 = vunpack.c.h.b16 %v265
        %v427 = vunpack.c.l.b16 %v266
        %v428 = vunpack.c.h.b16 %v266
        %v429 = vunpack.c.l.b16 %v267
        %v430 = vunpack.c.h.b16 %v267
        %v431 = vunpack.c.l.b16 %v268
        %v432 = vunpack.c.h.b16 %v268
        %v433 = vunpack.c.l.b16 %v269
        %v434 = vunpack.c.h.b16 %v269
        %v435 = vunpack.c.l.b16 %v270
        %v436 = vunpack.c.h.b16 %v270
        %v437 = vunpack.c.l.b16 %v271
        %v438 = vunpack.c.h.b16 %v271
        %v439 = vunpack.c.l.b16 %v272
        %v440 = vunpack.c.h.b16 %v272
        %v441 = vunpack.c.l.b16 %v273
        %v442 = vunpack.c.h.b16 %v273
        %v443 = vunpack.c.l.b16 %v274
        %v444 = vunpack.c.h.b16 %v274
        %v445 = vunpack.c.l.b16 %v275
        %v446 = vunpack.c.h.b16 %v275
        %v447 = vunpack.c.l.b16 %v276
        %v448 = vunpack.c.h.b16 %v276
        %v449 = vunpack.c.l.b16 %v277
        %v450 = vunpack.c.h.b16 %v277
        %v451 = vunpack.c.l.b16 %v278
        %v452 = vunpack.c.h.b16 %v278
        %v453 = vunpack.c.l.b16 %v279
        %v454 = vunpack.c.h.b16 %v279
        %v455 = vunpack.c.l.b16 %v280
        %v456 = vunpack.c.h.b16 %v280
        %v457 = vunpack.c.l.b16 %v281
        %v458 = vunpack.c.h.b16 %v281
        %v459 = vunpack.c.l.b16 %v282
        %v460 = vunpack.c.h.b16 %v282
        %v461 = vunpack.c.l.b16 %v283
        %v462 = vunpack.c.h.b16 %v283
        %v463 = vunpack.c.l.b16 %v284
        %v464 = vunpack.c.h.b16 %v284
        %v465 = vunpack.c.l.b16 %v285
        %v466 = vunpack.c.h.b16 %v285
        %v467 = vunpack.c.l.b16 %v286
        %v468 = vunpack.c.h.b16 %v286
        %v469 = vunpack.c.l.b16 %v287
        %v470 = vunpack.c.h.b16 %v287
        %v471 = vunpack.c.l.b16 %v288
        %v472 = vunpack.c.h.b16 %v288
        %v473 = vunpack.c.l.b16 %v289
        %v474 = vunpack.c.h.b16 %v289
        %v475 = vunpack.c.l.b16 %v290
        %v476 = vunpack.c.h.b16 %v290
        %v477 = vunpack.c.l.b16 %v291
        %v478 = vunpack.c.h.b16 %v291
        %v479 = vunpack.c.l.b16 %v292
        %v480 = vunpack.c.h.b16 %v292
        %v481 = vunpack.c.l.b16 %v293
        %v482 = vunpack.c.h.b16 %v293
        %v483 = vunpack.c.l.b16 %v294
        %v484 = vunpack.c.h.b16 %v294
        %v485 = vunpack.c.l.b16 %v295
        %v486 = vunpack.c.h.b16 %v295
        %v487 = vunpack.c.l.b16 %v296
        %v488 = vunpack.c.h.b16 %v296
        %v489 = vunpack.c.l.b16 %v297
        %v490 = vunpack.c.h.b16 %v297
        %v491 = vunpack.c.l.b16 %v298
        %v492 = vunpack.c.h.b16 %v298
        %v493 = vunpack.c.l.b16 %v299
        %v494 = vunpack.c.h.b16 %v299
        %v495 = vunpack.c.l.b16 %v300
        %v496 = vunpack.c.h.b16 %v300
        %v497 = vunpack.c.l.b16 %v301
        %v498 = vunpack.c.h.b16 %v301
        %v499 = vunpack.c.l.b16 %v302
        %v500 = vunpack.c.h.b16 %v302
        %v501 = vunpack.c.l.b16 %v303
        %v502 = vunpack.c.h.b16 %v303
        %v503 = vunpack.c.l.b16 %v304
        %v504 = vunpack.c.h.b16 %v304
        %v505 = vunpack.c.l.b16 %v305
        %v506 = vunpack.c.h.b16 %v305
        %v507 = vunpack.c.l.b16 %v306
        %v508 = vunpack.c.h.b16 %v306
        %v509 = vunpack.c.l.b16 %v307
        %v510 = vunpack.c.h.b16 %v307
        %v511 = vunpack.c.l.b16 %v308
        %v512 = vunpack.c.h.b16 %v308
        %v513 = vunpack.c.l.b16 %v309
        %v514 = vunpack.c.h.b16 %v309
        %v515 = vunpack.c.l.b16 %v310
        %v516 = vunpack.c.h.b16 %v310
        %v517 = vunpack.c.l.b16 %v311
        %v518 = vunpack.c.h.b16 %v311
        %v519 = vunpack.c.l.b16 %v312
        %v520 = vunpack.c.h.b16 %v312
        %v521 = vunpack.c.l.b16 %v313
        %v522 = vunpack.c.h.b16 %v313
        %v523 = vunpack.c.l.b16 %v314
        %v524 = vunpack.c.h.b16 %v314
        %v525 = vunpack.c.l.b16 %v315
        %v526 = vunpack.c.h.b16 %v315
        %v527 = vunpack.c.l.b16 %v316
        %v528 = vunpack.c.h.b16 %v316
        %v529 = vunpack.c.l.b16 %v317
        %v530 = vunpack.c.h.b16 %v317
        %v531 = vunpack.c.l.b16 %v318
        %v532 = vunpack.c.h.b16 %v318
        %v533 = vunpack.c.l.b16 %v319
        %v534 = vunpack.c.h.b16 %v319
        %v535 = vunpack.c.l.b16 %v320
        %v536 = vunpack.c.h.b16 %v320
        %v537 = vunpack.c.l.b16 %v321
        %v538 = vunpack.c.h.b16 %v321
        %v539 = vunpack.c.l.b16 %v322
        %v540 = vunpack.c.h.b16 %v322
        %v541 = vunpack.c.l.b16 %v323
        %v542 = vunpack.c.h.b16 %v323
        %v543 = vunpack.c.l.b16 %v324
        %v544 = vunpack.c.h.b16 %v324
        %v545 = vunpack.c.l.b16 %v325
        %v546 = vunpack.c.h.b16 %v325
        %v547 = vunpack.c.l.b16 %v326
        %v548 = vunpack.c.h.b16 %v326
        %v549 = vpack.c.b16 %v407, %v405
        %v550 = vpack.c.b16 %v408, %v406
        %v551 = vpack.c.b16 %v411, %v409
        %v552 = vpack.c.b16 %v412, %v410
        %v553 = vpack.c.b16 %v415, %v413
        %v554 = vpack.c.b16 %v416, %v414
        %v555 = vpack.c.b16 %v419, %v417
        %v556 = vpack.c.b16 %v420, %v418
        %v557 = vpack.c.b16 %v423, %v421
        %v558 = vpack.c.b16 %v424, %v422
        %v559 = vpack.c.b16 %v427, %v425
        %v560 = vpack.c.b16 %v428, %v426
        %v561 = vpack.c.b16 %v431, %v429
        %v562 = vpack.c.b16 %v432, %v430
        %v563 = vpack.c.b16 %v435, %v433
        %v564 = vpack.c.b16 %v436, %v434
        %v565 = vpack.c.b16 %v439, %v437
        %v566 = vpack.c.b16 %v440, %v438
        %v567 = vpack.c.b16 %v443, %v441
        %v568 = vpack.c.b16 %v444, %v442
        %v569 = vpack.c.b16 %v447, %v445
        %v570 = vpack.c.b16 %v448, %v446
        %v571 = vpack.c.b16 %v451, %v449
        %v572 = vpack.c.b16 %v452, %v450
        %v573 = vpack.c.b16 %v455, %v453
        %v574 = vpack.c.b16 %v456, %v454
        %v575 = vpack.c.b16 %v459, %v457
        %v576 = vpack.c.b16 %v460, %v458
        %v577 = vpack.c.b16 %v463, %v461
        %v578 = vpack.c.b16 %v464, %v462
        %v579 = vpack.c.b16 %v467, %v465
        %v580 = vpack.c.b16 %v468, %v466
        %v581 = vpack.c.b16 %v471, %v469
        %v582 = vpack.c.b16 %v472, %v470
        %v583 = vpack.c.b16 %v475, %v473
        %v584 = vpack.c.b16 %v476, %v474
        %v585 = vpack.c.b16 %v479, %v477
        %v586 = vpack.c.b16 %v480, %v478
        %v587 = vpack.c.b16 %v483, %v481
        %v588 = vpack.c.b16 %v484, %v482
        %v589 = vpack.c.b16 %v487, %v485
        %v590 = vpack.c.b16 %v488, %v486
        %v591 = vpack.c.b16 %v491, %v489
        %v592 = vpack.c.b16 %v492, %v490
        %v593 = vpack.c.b16 %v495, %v493
        %v594 = vpack.c.b16 %v496, %v494
        %v595 = vpack.c.b16 %v499, %v497
        %v596 = vpack.c.b16 %v500, %v498
        %v597 = vpack.c.b16 %v503, %v501
        %v598 = vpack.c.b16 %v504, %v502
        %v599 = vpack.c.b16 %v507, %v505
        %v600 = vpack.c.b16 %v508, %v506
        %v601 = vpack.c.b16 %v511, %v509
        %v602 = vpack.c.b16 %v512, %v510
        %v603 = vpack.c.b16 %v515, %v513
        %v604 = vpack.c.b16 %v516, %v514
        %v605 = vpack.c.b16 %v519, %v517
        %v606 = vpack.c.b16 %v520, %v518
        %v607 = vpack.c.b16 %v523, %v521
        %v608 = vpack.c.b16 %v524, %v522
        %v609 = vpack.c.b16 %v527, %v525
        %v610 = vpack.c.b16 %v528, %v526
        %v611 = vpack.c.b16 %v531, %v529
        %v612 = vpack.c.b16 %v532, %v530
        %v613 = vpack.c.b16 %v535, %v533
        %v614 = vpack.c.b16 %v536, %v534
        %v615 = vpack.c.b16 %v539, %v537
        %v616 = vpack.c.b16 %v540, %v538
        %v617 = vpack.c.b16 %v543, %v541
        %v618 = vpack.c.b16 %v544, %v542
        %v619 = vpack.c.b16 %v547, %v545
        %v620 = vpack.c.b16 %v548, %v546
        %v694 = vsel %vm241, %v254, 0
        %696 = vmatpush.bf16.msra.mxu0 %v563
        %697 = vmatpush.bf16.msra.mxu0 %v561
        %698 = vmatpush.bf16.msra.mxu0 %v559
        %699 = vmatpush.bf16.msra.mxu0 %v557
        %700 = vmatpush.bf16.msra.mxu0 %v555
        %701 = vmatpush.bf16.msra.mxu0 %v553
        %702 = vmatpush.bf16.msra.mxu0 %v551
        %703 = vmatpush.bf16.msra.mxu0 %v549
        %704 = vmatmul.bf16.gmra.mxu0 %v250
        %v705 = vpop.f32.mrf.mxu0
        %v706 = vadd.f32 %v329, %v705
        %v707 = vpop.f32.mrf.mxu0
        %v708 = vadd.f32 %v329, %v707
        %709 = vdwg.mxu0
        %710 = vmatpush.bf16.msra.mxu0 %v579
        %711 = vmatpush.bf16.msra.mxu0 %v577
        %712 = vmatpush.bf16.msra.mxu0 %v575
        %713 = vmatpush.bf16.msra.mxu0 %v573
        %714 = vmatpush.bf16.msra.mxu0 %v571
        %715 = vmatpush.bf16.msra.mxu0 %v569
        %716 = vmatpush.bf16.msra.mxu0 %v567
        %717 = vmatpush.bf16.msra.mxu0 %v565
        %718 = vmatmul.bf16.gmra.mxu0 %v251
        %v719 = vpop.f32.mrf.mxu0
        %v720 = vadd.f32 %v706, %v719
        %v721 = vpop.f32.mrf.mxu0
        %v722 = vadd.f32 %v708, %v721
        %723 = vdwg.mxu0
        %724 = vmatpush.bf16.msra.mxu0 %v595
        %725 = vmatpush.bf16.msra.mxu0 %v593
        %726 = vmatpush.bf16.msra.mxu0 %v591
        %727 = vmatpush.bf16.msra.mxu0 %v589
        %728 = vmatpush.bf16.msra.mxu0 %v587
        %729 = vmatpush.bf16.msra.mxu0 %v585
        %730 = vmatpush.bf16.msra.mxu0 %v583
        %731 = vmatpush.bf16.msra.mxu0 %v581
        %732 = vmatmul.bf16.gmra.mxu0 %v252
        %v733 = vpop.f32.mrf.mxu0
        %v734 = vadd.f32 %v720, %v733
        %v735 = vpop.f32.mrf.mxu0
        %v736 = vadd.f32 %v722, %v735
        %737 = vdwg.mxu0
        %738 = vmatpush.bf16.msra.mxu0 %v611
        %739 = vmatpush.bf16.msra.mxu0 %v609
        %740 = vmatpush.bf16.msra.mxu0 %v607
        %741 = vmatpush.bf16.msra.mxu0 %v605
        %742 = vmatpush.bf16.msra.mxu0 %v603
        %743 = vmatpush.bf16.msra.mxu0 %v601
        %744 = vmatpush.bf16.msra.mxu0 %v599
        %745 = vmatpush.bf16.msra.mxu0 %v597
        %746 = vmatmul.bf16.gmra.mxu0 %v253
        %v747 = vpop.f32.mrf.mxu0
        %v748 = vadd.f32 %v734, %v747
        %v749 = vpop.f32.mrf.mxu0
        %v750 = vadd.f32 %v736, %v749
        %751 = vdwg.mxu0
        %752 = vmatpush.bf16.msra.mxu0 0
        %753 = vmatpush.bf16.msra.mxu0 0
        %754 = vmatpush.bf16.msra.mxu0 0
        %755 = vmatpush.bf16.msra.mxu0 0
        %756 = vmatpush.bf16.msra.mxu0 %v619
        %757 = vmatpush.bf16.msra.mxu0 %v617
        %758 = vmatpush.bf16.msra.mxu0 %v615
        %759 = vmatpush.bf16.msra.mxu0 %v613
        %760 = vmatmul.bf16.gmra.mxu0 %v694
        %v761 = vpop.f32.mrf.mxu0
        %v762 = vadd.f32 %v748, %v761
        %v763 = vpop.f32.mrf.mxu0
        %v764 = vadd.f32 %v750, %v763
        %765 = vdwg.mxu0
        %766 = vmatpush.bf16.msra.mxu0 %v564
        %767 = vmatpush.bf16.msra.mxu0 %v562
        %768 = vmatpush.bf16.msra.mxu0 %v560
        %769 = vmatpush.bf16.msra.mxu0 %v558
        %770 = vmatpush.bf16.msra.mxu0 %v556
        %771 = vmatpush.bf16.msra.mxu0 %v554
        %772 = vmatpush.bf16.msra.mxu0 %v552
        %773 = vmatpush.bf16.msra.mxu0 %v550
        %774 = vmatmul.bf16.gmra.mxu0 %v250
        %v775 = vpop.f32.mrf.mxu0
        %v776 = vadd.f32 %v330, %v775
        %v777 = vpop.f32.mrf.mxu0
        %v778 = vadd.f32 %v330, %v777
        %779 = vdwg.mxu0
        %780 = vmatpush.bf16.msra.mxu0 %v580
        %781 = vmatpush.bf16.msra.mxu0 %v578
        %782 = vmatpush.bf16.msra.mxu0 %v576
        %783 = vmatpush.bf16.msra.mxu0 %v574
        %784 = vmatpush.bf16.msra.mxu0 %v572
        %785 = vmatpush.bf16.msra.mxu0 %v570
        %786 = vmatpush.bf16.msra.mxu0 %v568
        %787 = vmatpush.bf16.msra.mxu0 %v566
        %788 = vmatmul.bf16.gmra.mxu0 %v251
        %v789 = vpop.f32.mrf.mxu0
        %v790 = vadd.f32 %v776, %v789
        %v791 = vpop.f32.mrf.mxu0
        %v792 = vadd.f32 %v778, %v791
        %793 = vdwg.mxu0
        %794 = vmatpush.bf16.msra.mxu0 %v596
        %795 = vmatpush.bf16.msra.mxu0 %v594
        %796 = vmatpush.bf16.msra.mxu0 %v592
        %797 = vmatpush.bf16.msra.mxu0 %v590
        %798 = vmatpush.bf16.msra.mxu0 %v588
        %799 = vmatpush.bf16.msra.mxu0 %v586
        %800 = vmatpush.bf16.msra.mxu0 %v584
        %801 = vmatpush.bf16.msra.mxu0 %v582
        %802 = vmatmul.bf16.gmra.mxu0 %v252
        %v803 = vpop.f32.mrf.mxu0
        %v804 = vadd.f32 %v790, %v803
        %v805 = vpop.f32.mrf.mxu0
        %v806 = vadd.f32 %v792, %v805
        %807 = vdwg.mxu0
        %808 = vmatpush.bf16.msra.mxu0 %v612
        %809 = vmatpush.bf16.msra.mxu0 %v610
        %810 = vmatpush.bf16.msra.mxu0 %v608
        %811 = vmatpush.bf16.msra.mxu0 %v606
        %812 = vmatpush.bf16.msra.mxu0 %v604
        %813 = vmatpush.bf16.msra.mxu0 %v602
        %814 = vmatpush.bf16.msra.mxu0 %v600
        %815 = vmatpush.bf16.msra.mxu0 %v598
        %816 = vmatmul.bf16.gmra.mxu0 %v253
        %v817 = vpop.f32.mrf.mxu0
        %v818 = vadd.f32 %v804, %v817
        %v819 = vpop.f32.mrf.mxu0
        %v820 = vadd.f32 %v806, %v819
        %821 = vdwg.mxu0
        %822 = vmatpush.bf16.msra.mxu0 0
        %823 = vmatpush.bf16.msra.mxu0 0
        %824 = vmatpush.bf16.msra.mxu0 0
        %825 = vmatpush.bf16.msra.mxu0 0
        %826 = vmatpush.bf16.msra.mxu0 %v620
        %827 = vmatpush.bf16.msra.mxu0 %v618
        %828 = vmatpush.bf16.msra.mxu0 %v616
        %829 = vmatpush.bf16.msra.mxu0 %v614
        %830 = vmatmul.bf16.gmra.mxu0 %v694
        %v831 = vpop.f32.mrf.mxu0
        %v832 = vadd.f32 %v818, %v831
        %v833 = vpop.f32.mrf.mxu0
        %v834 = vadd.f32 %v820, %v833
        %835 = vdwg.mxu0
        %v836 = vmax.f32 %v762, 0.0
        %v837 = vmax.f32 %v832, 0.0
        %v838 = vmax.f32 %v764, 0.0
        %v839 = vmax.f32 %v834, 0.0
        %v842 = vrot.slane %v836, 1
        %v843 = vrot.slane %v836, 2
        %v844 = vrot.slane %v836, 3
        %v845 = vrot.slane %v836, 4
        %v846 = vrot.slane %v836, 5
        %v847 = vrot.slane %v836, 6
        %v848 = vrot.slane %v836, 7
        %v849 = vrot.slane %v838, 1
        %v850 = vrot.slane %v838, 2
        %v851 = vrot.slane %v838, 3
        %v852 = vrot.slane %v838, 4
        %v853 = vrot.slane %v838, 5
        %v854 = vrot.slane %v838, 6
        %v855 = vrot.slane %v838, 7
        %870 = vst [vmem:[%s180] sm:$0x1] %v836
        %871 = vst [vmem:[%s180 + $0x2] sm:$0x1] %v842
        %872 = vst [vmem:[%s180 + $0x4] sm:$0x1] %v843
        %873 = vst [vmem:[%s180 + $0x6] sm:$0x1] %v844
        %874 = vst [vmem:[%s180 + $0x8] sm:$0x1] %v845
        %875 = vst [vmem:[%s180 + $0xa] sm:$0x1] %v846
        %876 = vst [vmem:[%s180 + $0xc] sm:$0x1] %v847
        %877 = vst [vmem:[%s180 + $0xe] sm:$0x1] %v848
        %878 = vst [vmem:[%s180 + $0x10] sm:$0x1] %v838
        %879 = vst [vmem:[%s180 + $0x12] sm:$0x1] %v849
        %880 = vst [vmem:[%s180 + $0x14] sm:$0x1] %v850
        %881 = vst [vmem:[%s180 + $0x16] sm:$0x1] %v851
        %882 = vst [vmem:[%s180 + $0x18] sm:$0x1] %v852
        %883 = vst [vmem:[%s180 + $0x1a] sm:$0x1] %v853
        %884 = vst [vmem:[%s180 + $0x1c] sm:$0x1] %v854
        %885 = vst [vmem:[%s180 + $0x1e] sm:$0x1] %v855
        %v888 = vrot.slane %v837, 1
        %v889 = vrot.slane %v837, 2
        %v890 = vrot.slane %v837, 3
        %v891 = vrot.slane %v837, 4
        %v892 = vrot.slane %v837, 5
        %v893 = vrot.slane %v837, 6
        %v894 = vrot.slane %v837, 7
        %v895 = vrot.slane %v839, 1
        %v896 = vrot.slane %v839, 2
        %v897 = vrot.slane %v839, 3
        %v898 = vrot.slane %v839, 4
        %v899 = vrot.slane %v839, 5
        %v900 = vrot.slane %v839, 6
        %v901 = vrot.slane %v839, 7
        %916 = vst [vmem:[%s180 + $0x1] sm:$0x1] %v837
        %917 = vst [vmem:[%s180 + $0x3] sm:$0x1] %v888
        %918 = vst [vmem:[%s180 + $0x5] sm:$0x1] %v889
        %919 = vst [vmem:[%s180 + $0x7] sm:$0x1] %v890
        %920 = vst [vmem:[%s180 + $0x9] sm:$0x1] %v891
        %921 = vst [vmem:[%s180 + $0xb] sm:$0x1] %v892
        %922 = vst [vmem:[%s180 + $0xd] sm:$0x1] %v893
        %923 = vst [vmem:[%s180 + $0xf] sm:$0x1] %v894
        %924 = vst [vmem:[%s180 + $0x11] sm:$0x1] %v839
        %925 = vst [vmem:[%s180 + $0x13] sm:$0x1] %v895
        %926 = vst [vmem:[%s180 + $0x15] sm:$0x1] %v896
        %927 = vst [vmem:[%s180 + $0x17] sm:$0x1] %v897
        %928 = vst [vmem:[%s180 + $0x19] sm:$0x1] %v898
        %929 = vst [vmem:[%s180 + $0x1b] sm:$0x1] %v899
        %930 = vst [vmem:[%s180 + $0x1d] sm:$0x1] %v900
        %931 = vst [vmem:[%s180 + $0x1f] sm:$0x1] %v901
        %s932 = sand.u32 %s94, 1
        %s933 = scalar_lea.sflag [#allocation4], %s932
        %s934 = sand.u32 %s94, 1
        %s935 = smul.addr %s934, 32
        %s936 = scalar_lea.vmem [#allocation5], %s935
        // Predicated region
        $region37: #{tpu_custom_call.1} parent=31 // pred_check
          %p937 = pneg %p104
        $region38: #{tpu_custom_call.1} parent=31 // pred_check_branch
          %939 = sbr.rel (%p937) target = $region40
        $region39: #{tpu_custom_call.1} parent=31 // pred_region
          %941 = vsyncadd %s933, 0
          %s942 = smul.addr %s18, 16
          %s943 = smul.addr %s942, 2
          %s944 = scalar_lea.hbm %s3, %s943
          %s945 = sshll.u32 %s936, 4
          %s946 = int_to_ptr.vmem [resolvable:$true] %s945
          %s947 = sshll.u32 %s944, 4
          %s948 = int_to_ptr.hbm [resolvable:$true] %s947
          %953 = dma.vmem_to_hbm [thread:$0]  %s946, 512, %s948, %s933, 32, 32, 2
        $region40: #{tpu_custom_call.1} parent=31 // pred_fallthru
          _
      $region32: #{tpu_custom_call.1} parent=5 // pred_fallthru
        _
      %p954 = scmp.le.s32.totalorder 2, %s13
      // Predicated region
      $region41: #{tpu_custom_call.1} parent=5 // pred_check
        %p955 = pneg %p954
      $region42: #{tpu_custom_call.1} parent=5 // pred_check_branch
        %957 = sbr.rel (%p955) target = $region44
      $region43: #{tpu_custom_call.1} parent=5 // pred_region
        %s958 = ssub.s32 %s13, 2
        // Predicated region
        $region45: #{tpu_custom_call.1} parent=43 // pred_check
          %p959 = pneg %p110
        $region46: #{tpu_custom_call.1} parent=43 // pred_check_branch
          %961 = sbr.rel (%p959) target = $region48
        $region47: #{tpu_custom_call.1} parent=43 // pred_region
          %s962 = sand.u32 %s95, 1
          %s963 = scalar_lea.sflag [#allocation4], %s962
          %s964 = sand.u32 %s95, 1
          %s965 = smul.addr %s964, 32
          %s966 = scalar_lea.vmem [#allocation5], %s965
          %968 = dma.done %s963, 512
        $region48: #{tpu_custom_call.1} parent=43 // pred_fallthru
          _
      $region44: #{tpu_custom_call.1} parent=5 // pred_fallthru
        _
    $region6: #{tpu_custom_call.1} parent=1 // loop_footer
      %s17 = sadd.s32 1, %s13
    $region7: #{tpu_custom_call.1} parent=1 // loop_footer_branch
      %12 = sbr.rel target = $region3
    $region8: #{tpu_custom_call.1} parent=1 // loop_exit
      _
    %969 = vsyncpa [#allocation3], 1
    %s970 = scalar_lea.sflag [#allocation3], 1
    %971 = vsyncpa %s970, 1
    %972 = vsyncpa [#allocation4], 1
    %s973 = scalar_lea.sflag [#allocation4], 1
    %974 = vsyncpa %s973, 1

</llo_original>
